<compile_context>
chip_gen: v7x
topology: tpu7x:2x2x1
jax: 0.10.0
libtpu: 0.0.40
codegen_flags: <defaults>
</compile_context>

<pallas_src>
import numpy as np
import jax
import jax.numpy as jnp
from jax.experimental import pallas as pl
from jax.experimental.pallas import tpu as pltpu

PAD_IDX = 1  # fairseq Dictionary padding index convention


def _round_up(x: int, m: int) -> int:
    return ((x + m - 1) // m) * m


def _tile_plan(B: int, T: int, V: int):
    """Pick padded sizes and tile sizes.

    - TILE_T: full (8-aligned) T when T <= 128, else 128.
    - TILE_B: sized so the flattened MXU M dim (TILE_B*TILE_T) is >= 128 when
      possible, while keeping the (TILE_B, TILE_T) token block legal
      (sublane dim a multiple of 8 or equal to the full batch dim).
    - TILE_V: vocab reduction tile; at most 512 table rows resident per step.
    """
    if T <= 128:
        T_pad = _round_up(T, 8)
        tile_t = T_pad
    else:
        T_pad = _round_up(T, 128)
        tile_t = 128

    tb = max(1, 128 // tile_t)
    if tb >= B:
        tile_b = B
    elif tb % 8 == 0:
        tile_b = tb
    else:
        tile_b = 8
    B_pad = _round_up(B, tile_b)

    if V <= 512:
        V_pad = _round_up(V, 8)
        tile_v = V_pad
    else:
        V_pad = _round_up(V, 512)
        tile_v = 512

    return B_pad, T_pad, V_pad, tile_b, tile_t, tile_v


def _prenet_kernel(alpha_ref, tok_ref, pe_ref, emb_ref, x_ref, acc_ref):
    """One (batch-tile, time-tile) block of x, reduced over vocab tiles.

    alpha_ref : (1,)                 f32   SMEM  learned PE scale
    tok_ref   : (TILE_B, TILE_T)     int32 VMEM  token ids
    pe_ref    : (TILE_T, D)          f32   VMEM  sinusoidal positional encoding
    emb_ref   : (TILE_V, D)          f32   VMEM  vocab tile of the embedding table
    x_ref     : (TILE_B, TILE_T, D)  f32   VMEM  output block (same block across k)
    acc_ref   : (TILE_B*TILE_T, D)   f32   VMEM  accumulator scratch
    """
    tile_b, tile_t = tok_ref.shape
    tile_v, d = emb_ref.shape
    k = pl.program_id(2)

    @pl.when(k == 0)
    def _init():
        acc_ref[...] = jnp.zeros_like(acc_ref)

    # One-hot against this vocab tile, flattened to a single 2-D MXU matmul
    # (M = TILE_B*TILE_T) instead of TILE_B underfilled batched matmuls.
    rel = tok_ref[...] - k * tile_v                                  # (TILE_B, TILE_T)
    col = jax.lax.broadcasted_iota(jnp.int32, (tile_b, tile_t, tile_v), 2)
    onehot = (rel[:, :, None] == col).astype(jnp.float32)            # exact 0/1
    onehot2d = onehot.reshape(tile_b * tile_t, tile_v)               # 8-aligned merge
    acc_ref[...] += jnp.dot(onehot2d, emb_ref[...],
                            preferred_element_type=jnp.float32)

    @pl.when(k == pl.num_programs(2) - 1)
    def _finalize():
        scaled_pe = alpha_ref[0] * pe_ref[...]                       # (TILE_T, D), once per tile
        x = acc_ref[...].reshape(tile_b, tile_t, d)
        x_ref[...] = x + scaled_pe[None, :, :]


def make_sinusoidal_pe(max_len: int, d_model: int) -> jnp.ndarray:
    """ESPnet-style sinusoidal positional encoding table (max_len, d_model)."""
    position = np.arange(max_len, dtype=np.float32)[:, None]
    div_term = np.exp(
        np.arange(0, d_model, 2, dtype=np.float32) * -(np.log(10000.0) / d_model)
    )
    pe = np.zeros((max_len, d_model), dtype=np.float32)
    pe[:, 0::2] = np.sin(position * div_term)
    pe[:, 1::2] = np.cos(position * div_term)
    return jnp.asarray(pe)


def text_encoder_prenet(tokens, emb_table, pe_full, alpha, padding_idx=PAD_IDX):
    """tokens: (B, T) int. Returns (x: (B, T, D) f32, padding_mask: (B, T) bool)."""
    tokens = tokens.astype(jnp.int32)
    B, T = tokens.shape
    V, D = emb_table.shape

    # Padding mask: plain XLA compare (kept out of the kernel so we never emit
    # a lane-sparse (B, T) store from the kernel).
    padding_mask = tokens == padding_idx

    B_pad, T_pad, V_pad, tile_b, tile_t, tile_v = _tile_plan(B, T, V)

    tok_p = jnp.pad(tokens, ((0, B_pad - B), (0, T_pad - T)),
                    constant_values=padding_idx)
    emb_p = jnp.pad(emb_table.astype(jnp.float32), ((0, V_pad - V), (0, 0)))
    pe_p = jnp.pad(pe_full[:T].astype(jnp.float32), ((0, T_pad - T), (0, 0)))
    alpha = alpha.reshape((1,)).astype(jnp.float32)

    grid = (B_pad // tile_b, T_pad // tile_t, V_pad // tile_v)

    grid_spec = pltpu.PrefetchScalarGridSpec(
        num_scalar_prefetch=0,
        grid=grid,
        in_specs=[
            pl.BlockSpec((1,), lambda ib, it, k: (0,),
                         memory_space=pltpu.MemorySpace.SMEM),            # alpha
            pl.BlockSpec((tile_b, tile_t), lambda ib, it, k: (ib, it)),   # tokens
            pl.BlockSpec((tile_t, D), lambda ib, it, k: (it, 0)),         # pos. enc.
            pl.BlockSpec((tile_v, D), lambda ib, it, k: (k, 0)),          # emb tile
        ],
        out_specs=pl.BlockSpec((tile_b, tile_t, D),
                               lambda ib, it, k: (ib, it, 0)),
        scratch_shapes=[pltpu.VMEM((tile_b * tile_t, D), jnp.float32)],
    )

    x_p = pl.pallas_call(
        _prenet_kernel,
        out_shape=jax.ShapeDtypeStruct((B_pad, T_pad, D), jnp.float32),
        grid_spec=grid_spec,
        compiler_params=pltpu.CompilerParams(
            dimension_semantics=("parallel", "parallel", "arbitrary")),
    )(alpha, tok_p, pe_p, emb_p)

    return x_p[:B, :T], padding_mask


if __name__ == "__main__":
    # Small shapes consistent with the module: batch=2, seq=20, vocab=1000,
    # embed_dim=128, max_text_positions=64.  (vocab > TILE_V exercises the
    # tiled vocab reduction and the vocab/time padding paths.)
    B, T, V, D, MAX_LEN = 2, 20, 1000, 128, 64

    key = jax.random.PRNGKey(0)
    k_emb, k_tok = jax.random.split(key)

    # Deterministic parameter init (synthetic, not a checkpoint load).
    emb_table = jax.random.normal(k_emb, (V, D), jnp.float32) * 0.02
    emb_table = emb_table.at[PAD_IDX].set(0.0)      # nn.Embedding zeros the padding row
    alpha = jnp.ones((1,), jnp.float32)             # ScaledPositionalEncoding alpha init
    pe_full = make_sinusoidal_pe(MAX_LEN, D)

    tokens = jax.random.randint(k_tok, (B, T), 0, V, dtype=jnp.int32)
    tokens = tokens.at[0, T - 3:].set(PAD_IDX)      # put some padding in the first row

    x, mask = text_encoder_prenet(tokens, emb_table, pe_full, alpha)
    jax.block_until_ready((x, mask))

    # Reference check against plain-JAX semantics of the PyTorch module.
    ref_x = emb_table[tokens] + alpha[0] * pe_full[:T][None, :, :]
    ref_mask = tokens == PAD_IDX
    assert x.shape == (B, T, D)
    assert jnp.allclose(x, ref_x, atol=1e-5), "embedding + pos-enc mismatch"
    assert jnp.array_equal(mask, ref_mask), "padding mask mismatch"

    print("KERNEL_OK")
</pallas_src>

<mosaic_0001>
module attributes {stable_mosaic.version = 11 : i64} {
  func.func @_prenet_kernel(%arg0: i32, %arg1: i32, %arg2: i32, %arg3: memref<1xf32, #tpu.memory_space<smem>>, %arg4: memref<2x24xi32, #tpu.memory_space<vmem>>, %arg5: memref<24x128xf32, #tpu.memory_space<vmem>>, %arg6: memref<512x128xf32, #tpu.memory_space<vmem>>, %arg7: memref<2x24x128xf32, #tpu.memory_space<vmem>>, %arg8: memref<48x128xf32, #tpu.memory_space<vmem>>) attributes {dimension_semantics = [#tpu.dimension_semantics<parallel>, #tpu.dimension_semantics<parallel>, #tpu.dimension_semantics<arbitrary>], iteration_bounds = array<i64: 1, 1, 2>, scalar_prefetch = 0 : i64, scratch_operands = 1 : i64, tpu.core_type = #tpu.core_type<tc>, window_params = [{transform_indices = @transform_0, window_bounds = array<i64: 1>}, {transform_indices = @transform_1, window_bounds = array<i64: 2, 24>}, {transform_indices = @transform_2, window_bounds = array<i64: 24, 128>}, {transform_indices = @transform_3, window_bounds = array<i64: 512, 128>}, {transform_indices = @transform_4, window_bounds = array<i64: 2, 24, 128>}]} {
    %c0_i32 = arith.constant 0 : i32
    %0 = arith.cmpi eq, %arg2, %c0_i32 : i32
    %1 = arith.extui %0 : i1 to i32
    %c0_i32_0 = arith.constant 0 : i32
    %2 = arith.cmpi ne, %1, %c0_i32_0 : i32
    scf.if %2 {
      %cst_9 = arith.constant 0.000000e+00 : f32
      %22 = vector.broadcast %cst_9 : f32 to vector<48x128xf32>
      %c0_10 = arith.constant 0 : index
      %c0_11 = arith.constant 0 : index
      %23 = vector.load %arg8[%c0_10, %c0_11] : memref<48x128xf32, #tpu.memory_space<vmem>>, vector<48x128xf32>
      tpu.vector_store %arg8[%c0_10, %c0_11], %22 {strides = array<i32>} : memref<48x128xf32, #tpu.memory_space<vmem>>, vector<48x128xf32>,
    } else {
    }
    %c0 = arith.constant 0 : index
    %c0_1 = arith.constant 0 : index
    %3 = vector.load %arg4[%c0, %c0_1] : memref<2x24xi32, #tpu.memory_space<vmem>>, vector<2x24xi32>
    %c512_i32 = arith.constant 512 : i32
    %4 = arith.muli %arg2, %c512_i32 : i32
    %5 = vector.broadcast %4 : i32 to vector<2x24xi32>
    %6 = arith.subi %3, %5 : vector<2x24xi32>
    %7 = tpu.iota {dimensions = array<i32: 2>} : vector<2x24x512xi32>
    %8 = vector.shape_cast %6 : vector<2x24xi32> to vector<2x24x1xi32>
    %9 = vector.broadcast %8 : vector<2x24x1xi32> to vector<2x24x512xi32>
    %10 = arith.cmpi eq, %9, %7 : vector<2x24x512xi32>
    %11 = arith.extui %10 : vector<2x24x512xi1> to vector<2x24x512xi32>
    %12 = arith.sitofp %11 : vector<2x24x512xi32> to vector<2x24x512xf32>
    %13 = vector.shape_cast %12 : vector<2x24x512xf32> to vector<48x512xf32>
    %c0_2 = arith.constant 0 : index
    %c0_3 = arith.constant 0 : index
    %14 = vector.load %arg8[%c0_2, %c0_3] : memref<48x128xf32, #tpu.memory_space<vmem>>, vector<48x128xf32>
    %c0_4 = arith.constant 0 : index
    %c0_5 = arith.constant 0 : index
    %15 = vector.load %arg6[%c0_4, %c0_5] : memref<512x128xf32, #tpu.memory_space<vmem>>, vector<512x128xf32>
    %cst = arith.constant dense<0.000000e+00> : vector<48x128xf32>
    %16 = tpu.matmul %13, %15, %cst {dimension_numbers = #tpu.dot_dimension_numbers<[1], [0], [0], [1], [0, 0, 1, 1], [], []>} : vector<48x512xf32>, vector<512x128xf32>, vector<48x128xf32> -> vector<48x128xf32>
    %17 = arith.addf %14, %16 : vector<48x128xf32>
    %c0_6 = arith.constant 0 : index
    %c0_7 = arith.constant 0 : index
    %18 = vector.load %arg8[%c0_6, %c0_7] : memref<48x128xf32, #tpu.memory_space<vmem>>, vector<48x128xf32>
    tpu.vector_store %arg8[%c0_6, %c0_7], %17 {strides = array<i32>} : memref<48x128xf32, #tpu.memory_space<vmem>>, vector<48x128xf32>,
    %c1_i32 = arith.constant 1 : i32
    %19 = arith.cmpi eq, %arg2, %c1_i32 : i32
    %20 = arith.extui %19 : i1 to i32
    %c0_i32_8 = arith.constant 0 : i32
    %21 = arith.cmpi ne, %20, %c0_i32_8 : i32
    scf.if %21 {
      %c0_9 = arith.constant 0 : index
      %22 = memref.load %arg3[%c0_9] : memref<1xf32, #tpu.memory_space<smem>>
      %c0_10 = arith.constant 0 : index
      %c0_11 = arith.constant 0 : index
      %23 = vector.load %arg5[%c0_10, %c0_11] : memref<24x128xf32, #tpu.memory_space<vmem>>, vector<24x128xf32>
      %24 = vector.broadcast %22 : f32 to vector<24x128xf32>
      %25 = arith.mulf %24, %23 : vector<24x128xf32>
      %c0_12 = arith.constant 0 : index
      %c0_13 = arith.constant 0 : index
      %26 = vector.load %arg8[%c0_12, %c0_13] : memref<48x128xf32, #tpu.memory_space<vmem>>, vector<48x128xf32>
      %27 = vector.shape_cast %26 : vector<48x128xf32> to vector<2x24x128xf32>
      %28 = vector.shape_cast %25 : vector<24x128xf32> to vector<1x24x128xf32>
      %29 = vector.broadcast %28 : vector<1x24x128xf32> to vector<2x24x128xf32>
      %30 = arith.addf %27, %29 : vector<2x24x128xf32>
      %c0_14 = arith.constant 0 : index
      %c0_15 = arith.constant 0 : index
      %c0_16 = arith.constant 0 : index
      %31 = vector.load %arg7[%c0_14, %c0_15, %c0_16] : memref<2x24x128xf32, #tpu.memory_space<vmem>>, vector<2x24x128xf32>
      tpu.vector_store %arg7[%c0_14, %c0_15, %c0_16], %30 {strides = array<i32>} : memref<2x24x128xf32, #tpu.memory_space<vmem>>, vector<2x24x128xf32>,
    } else {
    }
    return
  }
  func.func @transform_0(%arg0: i32, %arg1: i32, %arg2: i32) -> i32 {
    %c0_i32 = arith.constant 0 : i32
    %c0_i32_0 = arith.constant 0 : i32
    return %c0_i32 : i32
  }
  func.func @transform_1(%arg0: i32, %arg1: i32, %arg2: i32) -> (i32, i32) {
    %c0_i32 = arith.constant 0 : i32
    return %arg0, %arg1 : i32, i32
  }
  func.func @transform_2(%arg0: i32, %arg1: i32, %arg2: i32) -> (i32, i32) {
    %c0_i32 = arith.constant 0 : i32
    %c0_i32_0 = arith.constant 0 : i32
    return %arg1, %c0_i32 : i32, i32
  }
  func.func @transform_3(%arg0: i32, %arg1: i32, %arg2: i32) -> (i32, i32) {
    %c0_i32 = arith.constant 0 : i32
    %c0_i32_0 = arith.constant 0 : i32
    return %arg2, %c0_i32 : i32, i32
  }
  func.func @transform_4(%arg0: i32, %arg1: i32, %arg2: i32) -> (i32, i32, i32) {
    %c0_i32 = arith.constant 0 : i32
    %c0_i32_0 = arith.constant 0 : i32
    return %arg0, %arg1, %c0_i32 : i32, i32, i32
  }
}

</mosaic_0001>

<llo_original>
// kernel: tpu_custom_call.1
$region0: #{tpu_custom_call.1}
  #allocation0 [shape = 'u32[]', space=smem, size = 0x4, offset = 0x4, fixed_abs, tag = 'smem constant byte address 0x4 - core index']
  #allocation1 [shape = 'u32[144,128]{1,0:T(1,128)}', space=vmem, size = 0x12000, scoped, tag = 'internal scratch']
  #allocation2 [shape = 'f32[48,128]{1,0:T(8,128)}', space=vmem, size = 0x6000, scoped, tag = 'scratch operand']
  #allocation3 [shape = 'f32[1]{0:T(128)S(6)}', space=smem, size = 0x200, scoped, tag = 'scoped memory for tpu_custom_call.1']
  %s0 = inlined_call_operand.<no memory space> [shape: f32[1], index: 0, kind: input, shape index: {}]
  %s1 = inlined_call_operand.vmem [shape: s32[2,24], index: 1, kind: input, shape index: {}]
  %s2 = inlined_call_operand.hbm [shape: f32[24,128], index: 2, kind: input, shape index: {}]
  %s3 = inlined_call_operand.hbm [shape: f32[1024,128], index: 3, kind: input, shape index: {}]
  %s4 = inlined_call_operand.hbm [shape: f32[2,24,128], index: 4, kind: output, shape index: {}]
  %s5 = sld [smem:[#allocation0]]
  $region65: #{tpu_custom_call.1} parent=0
    _
  %s7 = ssub.s32 1, %s5
  %s8 = scalar_select 0, %s7, %s5
  %9 = sst [smem:[#allocation3]] %s0
  $region1: #{tpu_custom_call.1} parent=0
    #allocation4 [shape = 'u8[12288]{0}', space=vmem, size = 0x3000, scoped, tag = 'input window, operand 2, single buffered']
    #allocation5 [shape = 's32[2]{0}', space=sflag, size = 0x8, scoped, tag = 'scoped memory for tpu_custom_call.1']
    #allocation6 [shape = 's32[2]{0}', space=sflag, size = 0x8, scoped, tag = 'scoped memory for tpu_custom_call.1']
    #allocation7 [shape = 'u8[524288]{0}', space=vmem, size = 0x80000, scoped, tag = 'input window, operand 3']
    #allocation8 [shape = 's32[2]{0}', space=sflag, size = 0x8, scoped, tag = 'scoped memory for tpu_custom_call.1']
    #allocation9 [shape = 'u8[24576]{0}', space=vmem, size = 0x6000, scoped, tag = 'output window, operand 0, single buffered']
    %10 = vsyncpa [#allocation5], 0
    %11 = vsyncpa [#allocation8], 0
    %s12 = scalar_lea.sflag [#allocation8], 1
    %13 = vsyncpa %s12, 0
    %14 = vsyncpa [#allocation6], 0
    loop: start=0, step=1, limit=4
    $region2: #{tpu_custom_call.1} parent=1 // loop_pre_header
      _
    $region3: #{tpu_custom_call.1} parent=1 // loop_header
      %s16 = sphi 0, %s20
      %p17 = scmp.ge.s32.totalorder %s16, 4
      %s23 = sphi 0, %s42
      %s24 = sphi 0, %s38
      %s25 = sphi 0, %s34
      %s26 = sphi 0, %s23
      %s27 = sphi 0, %s24
      %s28 = sphi 0, %s25
      %s29 = sphi 0, %s26
      %s30 = sphi 0, %s27
      %s31 = sphi 0, %s28
      %s43 = sphi 0, %s43
      %s45 = sphi 0, %s43
      %s46 = sphi 0, %s45
      %s60 = sphi 0, %s46
      %s68 = sphi 0, %s70
      %s71 = sphi 0, %s68
      %s72 = sphi 0, %s71
      %s88 = sphi 0, %s72
      %s94 = sphi 0, %s96
      %s97 = sphi 0, %s94
      %s98 = sphi 0, %s97
      %s114 = sphi 0, %s98
      %s120 = sphi 0, %s122
      %s123 = sphi 0, %s120
      %s124 = sphi 0, %s123
      %s140 = sphi 0, %s124
      %s148 = sphi 0, %s150
      %s151 = sphi 0, %s148
      %s152 = sphi 0, %s151
      %s168 = sphi 0, %s152
    $region4: #{tpu_custom_call.1} parent=1 // loop_header_branch
      %19 = sbr.rel (%p17) target = $region8
    $region5: #{tpu_custom_call.1} parent=1 // loop_body
      %s21 = ssub.s32 %s16, 1
      %s22 = ssub.s32 %s16, 2
      %s32 = sadd.s32 1, %s25
      %p33 = scmp.ge.s32.totalorder %s32, 2
      %s34 = scalar_select %p33, 0, %s32
      %s35 = sadd.s32 1, %s24
      %s36 = scalar_select %p33, %s35, %s24
      %p37 = scmp.ge.s32.totalorder %s36, 1
      %s38 = scalar_select %p37, 0, %s36
      %s39 = sadd.s32 1, %s23
      %s40 = scalar_select %p37, %s39, %s23
      %p41 = scmp.ge.s32.totalorder %s40, 1
      %s42 = scalar_select %p41, 0, %s40
      %s44 = sadd.s32 %s43, 1
      %p47 = scmp.eq.s32.totalorder %s16, 1
      %p48 = scmp.ne.s32.totalorder %s43, %s45
      %p49 = scmp.eq.s32.totalorder %s16, 0
      %p50 = por %p48, %p49
      %p51 = scmp.ne.s32.totalorder %s43, %s45
      %p52 = scmp.eq.s32.totalorder %s21, 1
      %p53 = por %p51, %p52
      %p54 = scmp.ne.s32.totalorder %s45, %s46
      %p55 = scmp.eq.s32.totalorder %s21, 0
      %p56 = por %p54, %p55
      %p57 = scmp.ne.s32.totalorder %s45, %s46
      %p58 = scmp.eq.s32.totalorder %s22, 1
      %p59 = por %p57, %p58
      %p61 = scmp.ne.s32.totalorder %s46, %s60
      %p62 = scmp.eq.s32.totalorder %s22, 0
      %p63 = por %p61, %p62
      %s64 = ssub.s32 %s23, %s42
      %s65 = ssub.s32 %s24, %s38
      %s66 = sor.u32 %s64, %s65
      %p67 = scmp.eq.s32.totalorder %s66, 0
      %s69 = sadd.s32 %s68, 1
      %s70 = scalar_select %p67, %s68, %s69
      %p73 = pneg %p67
      %p74 = scmp.eq.s32.totalorder %s16, 1
      %p75 = por %p73, %p74
      %p76 = scmp.ne.s32.totalorder %s68, %s71
      %p77 = scmp.eq.s32.totalorder %s16, 0
      %p78 = por %p76, %p77
      %p79 = scmp.ne.s32.totalorder %s68, %s71
      %p80 = scmp.eq.s32.totalorder %s21, 1
      %p81 = por %p79, %p80
      %p82 = scmp.ne.s32.totalorder %s71, %s72
      %p83 = scmp.eq.s32.totalorder %s21, 0
      %p84 = por %p82, %p83
      %p85 = scmp.ne.s32.totalorder %s71, %s72
      %p86 = scmp.eq.s32.totalorder %s22, 1
      %p87 = por %p85, %p86
      %p89 = scmp.ne.s32.totalorder %s72, %s88
      %p90 = scmp.eq.s32.totalorder %s22, 0
      %p91 = por %p89, %p90
      %s92 = ssub.s32 %s24, %s38
      %p93 = scmp.eq.s32.totalorder %s92, 0
      %s95 = sadd.s32 %s94, 1
      %s96 = scalar_select %p93, %s94, %s95
      %p99 = pneg %p93
      %p100 = scmp.eq.s32.totalorder %s16, 1
      %p101 = por %p99, %p100
      %p102 = scmp.ne.s32.totalorder %s94, %s97
      %p103 = scmp.eq.s32.totalorder %s16, 0
      %p104 = por %p102, %p103
      %p105 = scmp.ne.s32.totalorder %s94, %s97
      %p106 = scmp.eq.s32.totalorder %s21, 1
      %p107 = por %p105, %p106
      %p108 = scmp.ne.s32.totalorder %s97, %s98
      %p109 = scmp.eq.s32.totalorder %s21, 0
      %p110 = por %p108, %p109
      %p111 = scmp.ne.s32.totalorder %s97, %s98
      %p112 = scmp.eq.s32.totalorder %s22, 1
      %p113 = por %p111, %p112
      %p115 = scmp.ne.s32.totalorder %s98, %s114
      %p116 = scmp.eq.s32.totalorder %s22, 0
      %p117 = por %p115, %p116
      %s118 = ssub.s32 %s25, %s34
      %p119 = scmp.eq.s32.totalorder %s118, 0
      %s121 = sadd.s32 %s120, 1
      %s122 = scalar_select %p119, %s120, %s121
      %p125 = pneg %p119
      %p126 = scmp.eq.s32.totalorder %s16, 1
      %p127 = por %p125, %p126
      %p128 = scmp.ne.s32.totalorder %s120, %s123
      %p129 = scmp.eq.s32.totalorder %s16, 0
      %p130 = por %p128, %p129
      %p131 = scmp.ne.s32.totalorder %s120, %s123
      %p132 = scmp.eq.s32.totalorder %s21, 1
      %p133 = por %p131, %p132
      %p134 = scmp.ne.s32.totalorder %s123, %s124
      %p135 = scmp.eq.s32.totalorder %s21, 0
      %p136 = por %p134, %p135
      %p137 = scmp.ne.s32.totalorder %s123, %s124
      %p138 = scmp.eq.s32.totalorder %s22, 1
      %p139 = por %p137, %p138
      %p141 = scmp.ne.s32.totalorder %s124, %s140
      %p142 = scmp.eq.s32.totalorder %s22, 0
      %p143 = por %p141, %p142
      %s144 = ssub.s32 %s23, %s42
      %s145 = ssub.s32 %s24, %s38
      %s146 = sor.u32 %s144, %s145
      %p147 = scmp.eq.s32.totalorder %s146, 0
      %s149 = sadd.s32 %s148, 1
      %s150 = scalar_select %p147, %s148, %s149
      %p153 = pneg %p147
      %p154 = scmp.eq.s32.totalorder %s16, 1
      %p155 = por %p153, %p154
      %p156 = scmp.ne.s32.totalorder %s148, %s151
      %p157 = scmp.eq.s32.totalorder %s16, 0
      %p158 = por %p156, %p157
      %p159 = scmp.ne.s32.totalorder %s148, %s151
      %p160 = scmp.eq.s32.totalorder %s21, 1
      %p161 = por %p159, %p160
      %p162 = scmp.ne.s32.totalorder %s151, %s152
      %p163 = scmp.eq.s32.totalorder %s21, 0
      %p164 = por %p162, %p163
      %p165 = scmp.ne.s32.totalorder %s151, %s152
      %p166 = scmp.eq.s32.totalorder %s22, 1
      %p167 = por %p165, %p166
      %p169 = scmp.ne.s32.totalorder %s152, %s168
      %p170 = scmp.eq.s32.totalorder %s22, 0
      %p171 = por %p169, %p170
      %p172 = scmp.le.s32.totalorder 1, %s16
      %p173 = scmp.lt.s32.totalorder %s16, 3
      %p174 = pnand %p172, %p173
      %p175 = pneg %p174
      // Predicated region
      $region9: #{tpu_custom_call.1} parent=5 // pred_check
        _
      $region10: #{tpu_custom_call.1} parent=5 // pred_check_branch
        %177 = sbr.rel (%p174) target = $region12
      $region11: #{tpu_custom_call.1} parent=5 // pred_region
        %s178 = ssub.s32 %s16, 1
        // Predicated region
        $region13: #{tpu_custom_call.1} parent=11 // pred_check
          %p179 = pneg %p56
        $region14: #{tpu_custom_call.1} parent=11 // pred_check_branch
          %181 = sbr.rel (%p179) target = $region16
        $region15: #{tpu_custom_call.1} parent=11 // pred_region
          _
        $region16: #{tpu_custom_call.1} parent=11 // pred_fallthru
          _
        // Predicated region
        $region17: #{tpu_custom_call.1} parent=11 // pred_check
          %p182 = pneg %p84
        $region18: #{tpu_custom_call.1} parent=11 // pred_check_branch
          %184 = sbr.rel (%p182) target = $region20
        $region19: #{tpu_custom_call.1} parent=11 // pred_region
          %p185 = scmp.lt.s32.totalorder %s26, 0
          %s186 = scalar_select %p185, %s26, 0
          %p187 = scmp.lt.s32.totalorder %s27, 0
          %s188 = scalar_select %p187, %s27, 0
          %s189 = sadd.s32 %s188, %s186
          %s190 = smul.addr %s189, 2
          %s191 = scalar_lea.vmem %s1, %s190
        $region20: #{tpu_custom_call.1} parent=11 // pred_fallthru
          _
        // Predicated region
        $region21: #{tpu_custom_call.1} parent=11 // pred_check
          %p192 = pneg %p110
        $region22: #{tpu_custom_call.1} parent=11 // pred_check_branch
          %194 = sbr.rel (%p192) target = $region24
        $region23: #{tpu_custom_call.1} parent=11 // pred_region
          %s195 = smul.u32 3, %s27
          %s197 = ssub.s32 384, 384
          %198 = vsyncadd [#allocation5], %s197
          %s199 = smul.addr %s195, 128
          %s200 = scalar_lea.hbm %s2, %s199
          %s201 = sshll.u32 [#allocation4], 4
          %s202 = int_to_ptr.vmem [resolvable:$true] %s201
          %207 = dma.hbm_to_vmem [thread:$0]  %s200, 384, %s202, [#allocation5], 128, 128, 8
        $region24: #{tpu_custom_call.1} parent=11 // pred_fallthru
          _
      $region12: #{tpu_custom_call.1} parent=5 // pred_fallthru
        _
      %p208 = scmp.lt.s32.totalorder %s16, 2
      // Predicated region
      $region25: #{tpu_custom_call.1} parent=5 // pred_check
        %p209 = pneg %p208
      $region26: #{tpu_custom_call.1} parent=5 // pred_check_branch
        %211 = sbr.rel (%p209) target = $region28
      $region27: #{tpu_custom_call.1} parent=5 // pred_region
        // Predicated region
        $region29: #{tpu_custom_call.1} parent=27 // pred_check
          %p212 = pneg %p130
        $region30: #{tpu_custom_call.1} parent=27 // pred_check_branch
          %214 = sbr.rel (%p212) target = $region32
        $region31: #{tpu_custom_call.1} parent=27 // pred_region
          %s215 = sand.u32 %s120, 1
          %s216 = scalar_lea.sflag [#allocation8], %s215
          %s217 = sand.u32 %s120, 1
          %s218 = smul.addr %s217, 512
          %s219 = scalar_lea.vmem [#allocation7], %s218
          %s220 = smul.u32 64, %s25
          %s222 = ssub.s32 8192, 8192
          %223 = vsyncadd %s216, %s222
          %s224 = smul.addr %s220, 128
          %s225 = scalar_lea.hbm %s3, %s224
          %s226 = sshll.u32 %s219, 4
          %s227 = int_to_ptr.vmem [resolvable:$true] %s226
          %232 = dma.hbm_to_vmem [thread:$0]  %s225, 8192, %s227, %s216, 128, 128, 8
        $region32: #{tpu_custom_call.1} parent=27 // pred_fallthru
          _
      $region28: #{tpu_custom_call.1} parent=5 // pred_fallthru
        _
      %p233 = scmp.le.s32.totalorder 1, %s16
      %p234 = scmp.lt.s32.totalorder %s16, 3
      %p235 = pnand %p233, %p234
      %p236 = pneg %p235
      // Predicated region
      $region33: #{tpu_custom_call.1} parent=5 // pred_check
        _
      $region34: #{tpu_custom_call.1} parent=5 // pred_check_branch
        %238 = sbr.rel (%p235) target = $region36
      $region35: #{tpu_custom_call.1} parent=5 // pred_region
        %s239 = ssub.s32 %s16, 1
        // Predicated region
        $region37: #{tpu_custom_call.1} parent=35 // pred_check
          %p240 = pneg %p110
        $region38: #{tpu_custom_call.1} parent=35 // pred_check_branch
          %242 = sbr.rel (%p240) target = $region40
        $region39: #{tpu_custom_call.1} parent=35 // pred_region
          %243 = dma.done [#allocation5], 384
        $region40: #{tpu_custom_call.1} parent=35 // pred_fallthru
          _
        %s244 = sand.u32 %s123, 1
        %s245 = scalar_lea.sflag [#allocation8], %s244
        %s246 = sand.u32 %s123, 1
        %s247 = smul.addr %s246, 512
        %s248 = scalar_lea.vmem [#allocation7], %s247
        // Predicated region
        $region41: #{tpu_custom_call.1} parent=35 // pred_check
          %p249 = pneg %p136
        $region42: #{tpu_custom_call.1} parent=35 // pred_check_branch
          %251 = sbr.rel (%p249) target = $region44
        $region43: #{tpu_custom_call.1} parent=35 // pred_region
          %252 = dma.done %s245, 8192
        $region44: #{tpu_custom_call.1} parent=35 // pred_fallthru
          _
        %p253 = pneg %p56
        %p254 = pneg %p53
        %p255 = scmp.lt.s32.totalorder %s26, 0
        %s256 = scalar_select %p255, %s26, 0
        %p257 = scmp.lt.s32.totalorder %s27, 0
        %s258 = scalar_select %p257, %s27, 0
        %s259 = sadd.s32 %s258, %s256
        %s260 = smul.addr %s259, 2
        %s261 = scalar_lea.vmem %s1, %s260
        %p262 = pneg %p84
        %p263 = pneg %p81
        %p264 = pneg %p110
        %p265 = pneg %p107
        %s266 = sand.u32 %s123, 1
        %s267 = scalar_lea.sflag [#allocation8], %s266
        %s268 = sand.u32 %s123, 1
        %s269 = smul.addr %s268, 512
        %s270 = scalar_lea.vmem [#allocation7], %s269
        %p271 = pneg %p136
        %p272 = pneg %p133
        %p273 = pneg %p164
        %p274 = pneg %p161
        %p275 = scmp.lt.s32.totalorder %s26, 0
        %s276 = scalar_select %p275, %s26, 0
        %p277 = scmp.lt.s32.totalorder %s27, 0
        %s278 = scalar_select %p277, %s27, 0
        %s279 = sadd.s32 %s278, %s276
        %s280 = smul.addr %s279, 2
        %s281 = scalar_lea.vmem %s1, %s280
        %s282 = smul.u32 3, %s27
        %s283 = smul.u32 64, %s28
        %s284 = smul.u32 2, %s26
        %s285 = smul.u32 3, %s27
        %p286 = scmp.eq.s32.totalorder %s28, 0
        // Predicated region
        $region45: #{tpu_custom_call.1} parent=35 // pred_check
          %p287 = pneg %p286
        $region46: #{tpu_custom_call.1} parent=35 // pred_check_branch
          %289 = sbr.rel (%p287) target = $region48
        $region47: #{tpu_custom_call.1} parent=35 // pred_region
          %290 = vst [vmem:[#allocation2] sm:$0xff] 0.0
          %291 = vst [vmem:[#allocation2 + $0x8] sm:$0xff] 0.0
          %292 = vst [vmem:[#allocation2 + $0x10] sm:$0xff] 0.0
          %293 = vst [vmem:[#allocation2 + $0x18] sm:$0xff] 0.0
          %294 = vst [vmem:[#allocation2 + $0x20] sm:$0xff] 0.0
          %295 = vst [vmem:[#allocation2 + $0x28] sm:$0xff] 0.0
        $region48: #{tpu_custom_call.1} parent=35 // pred_fallthru
          _
        %v296 = vld [vmem:[%s281] sm:$0x3]
        %s297 = smul.u32 %s28, 512
        %v298 = vstv %s297
        %v299 = vsub.s32 %v296, %v298
        %v300 = vlaneseq
        %v301 = vand.u32 %v300, 127
        %v302 = vadd.s32 %v301, 128
        %v303 = vadd.s32 %v301, 256
        %v304 = vadd.s32 %v301, 384
        %v305 = vlaneseq
        %v306 = vshrl.u32 %v305, 7
        %v307 = vsub.s32 0, %v306
        %v308 = vrot.slane %v299, %v307
        %310 = vbcast.lane.b32.xlu0 %v308, 256
        %v311 = vpop.permute.xlu0 %310
        %s313 = sor.u32 256, 8
        %314 = vbcast.lane.b32.xlu0 %v308, %s313
        %v315 = vpop.permute.xlu0 %314
        %s317 = sor.u32 256, 16
        %318 = vbcast.lane.b32.xlu0 %v308, %s317
        %v319 = vpop.permute.xlu0 %318
        %v320 = vlaneseq
        %v321 = vshrl.u32 %v320, 7
        %v322 = vsub.s32 1, %v321
        %v323 = vrot.slane %v299, %v322
        %325 = vbcast.lane.b32.xlu0 %v323, 256
        %v326 = vpop.permute.xlu0 %325
        %s328 = sor.u32 256, 8
        %329 = vbcast.lane.b32.xlu0 %v323, %s328
        %v330 = vpop.permute.xlu0 %329
        %s332 = sor.u32 256, 16
        %333 = vbcast.lane.b32.xlu0 %v323, %s332
        %v334 = vpop.permute.xlu0 %333
        %vm335 = vcmp.eq.s32.totalorder %v311, %v301
        %vm336 = vcmp.eq.s32.totalorder %v311, %v302
        %vm337 = vcmp.eq.s32.totalorder %v311, %v303
        %vm338 = vcmp.eq.s32.totalorder %v311, %v304
        %vm339 = vcmp.eq.s32.totalorder %v315, %v301
        %vm340 = vcmp.eq.s32.totalorder %v315, %v302
        %vm341 = vcmp.eq.s32.totalorder %v315, %v303
        %vm342 = vcmp.eq.s32.totalorder %v315, %v304
        %vm343 = vcmp.eq.s32.totalorder %v319, %v301
        %vm344 = vcmp.eq.s32.totalorder %v319, %v302
        %vm345 = vcmp.eq.s32.totalorder %v319, %v303
        %vm346 = vcmp.eq.s32.totalorder %v319, %v304
        %vm347 = vcmp.eq.s32.totalorder %v326, %v301
        %vm348 = vcmp.eq.s32.totalorder %v326, %v302
        %vm349 = vcmp.eq.s32.totalorder %v326, %v303
        %vm350 = vcmp.eq.s32.totalorder %v326, %v304
        %vm351 = vcmp.eq.s32.totalorder %v330, %v301
        %vm352 = vcmp.eq.s32.totalorder %v330, %v302
        %vm353 = vcmp.eq.s32.totalorder %v330, %v303
        %vm354 = vcmp.eq.s32.totalorder %v330, %v304
        %vm355 = vcmp.eq.s32.totalorder %v334, %v301
        %vm356 = vcmp.eq.s32.totalorder %v334, %v302
        %vm357 = vcmp.eq.s32.totalorder %v334, %v303
        %vm358 = vcmp.eq.s32.totalorder %v334, %v304
        %v359 = vsel %vm335, 1, 0
        %v360 = vsel %vm336, 1, 0
        %v361 = vsel %vm337, 1, 0
        %v362 = vsel %vm338, 1, 0
        %v363 = vsel %vm339, 1, 0
        %v364 = vsel %vm340, 1, 0
        %v365 = vsel %vm341, 1, 0
        %v366 = vsel %vm342, 1, 0
        %v367 = vsel %vm343, 1, 0
        %v368 = vsel %vm344, 1, 0
        %v369 = vsel %vm345, 1, 0
        %v370 = vsel %vm346, 1, 0
        %v371 = vsel %vm347, 1, 0
        %v372 = vsel %vm348, 1, 0
        %v373 = vsel %vm349, 1, 0
        %v374 = vsel %vm350, 1, 0
        %v375 = vsel %vm351, 1, 0
        %v376 = vsel %vm352, 1, 0
        %v377 = vsel %vm353, 1, 0
        %v378 = vsel %vm354, 1, 0
        %v379 = vsel %vm355, 1, 0
        %v380 = vsel %vm356, 1, 0
        %v381 = vsel %vm357, 1, 0
        %v382 = vsel %vm358, 1, 0
        %v383 = vcvt.s32.f32 %v359
        %v384 = vcvt.s32.f32 %v360
        %v385 = vcvt.s32.f32 %v361
        %v386 = vcvt.s32.f32 %v362
        %v387 = vcvt.s32.f32 %v363
        %v388 = vcvt.s32.f32 %v364
        %v389 = vcvt.s32.f32 %v365
        %v390 = vcvt.s32.f32 %v366
        %v391 = vcvt.s32.f32 %v367
        %v392 = vcvt.s32.f32 %v368
        %v393 = vcvt.s32.f32 %v369
        %v394 = vcvt.s32.f32 %v370
        %v395 = vcvt.s32.f32 %v371
        %v396 = vcvt.s32.f32 %v372
        %v397 = vcvt.s32.f32 %v373
        %v398 = vcvt.s32.f32 %v374
        %v399 = vcvt.s32.f32 %v375
        %v400 = vcvt.s32.f32 %v376
        %v401 = vcvt.s32.f32 %v377
        %v402 = vcvt.s32.f32 %v378
        %v403 = vcvt.s32.f32 %v379
        %v404 = vcvt.s32.f32 %v380
        %v405 = vcvt.s32.f32 %v381
        %v406 = vcvt.s32.f32 %v382
        %v407 = vld [vmem:[#allocation2] sm:$0xff]
        %v408 = vld [vmem:[#allocation2 + $0x8] sm:$0xff]
        %v409 = vld [vmem:[#allocation2 + $0x10] sm:$0xff]
        %v410 = vld [vmem:[#allocation2 + $0x18] sm:$0xff]
        %v411 = vld [vmem:[#allocation2 + $0x20] sm:$0xff]
        %v412 = vld [vmem:[#allocation2 + $0x28] sm:$0xff]
        %v413 = vld [vmem:[%s248] sm:$0xff]
        %v414 = vld [vmem:[%s248 + $0x8] sm:$0xff]
        %v415 = vld [vmem:[%s248 + $0x10] sm:$0xff]
        %v416 = vld [vmem:[%s248 + $0x18] sm:$0xff]
        %v417 = vld [vmem:[%s248 + $0x20] sm:$0xff]
        %v418 = vld [vmem:[%s248 + $0x28] sm:$0xff]
        %v419 = vld [vmem:[%s248 + $0x30] sm:$0xff]
        %v420 = vld [vmem:[%s248 + $0x38] sm:$0xff]
        %v421 = vld [vmem:[%s248 + $0x40] sm:$0xff]
        %v422 = vld [vmem:[%s248 + $0x48] sm:$0xff]
        %v423 = vld [vmem:[%s248 + $0x50] sm:$0xff]
        %v424 = vld [vmem:[%s248 + $0x58] sm:$0xff]
        %v425 = vld [vmem:[%s248 + $0x60] sm:$0xff]
        %v426 = vld [vmem:[%s248 + $0x68] sm:$0xff]
        %v427 = vld [vmem:[%s248 + $0x70] sm:$0xff]
        %v428 = vld [vmem:[%s248 + $0x78] sm:$0xff]
        %v429 = vld [vmem:[%s248 + $0x80] sm:$0xff]
        %v430 = vld [vmem:[%s248 + $0x88] sm:$0xff]
        %v431 = vld [vmem:[%s248 + $0x90] sm:$0xff]
        %v432 = vld [vmem:[%s248 + $0x98] sm:$0xff]
        %v433 = vld [vmem:[%s248 + $0xa0] sm:$0xff]
        %v434 = vld [vmem:[%s248 + $0xa8] sm:$0xff]
        %v435 = vld [vmem:[%s248 + $0xb0] sm:$0xff]
        %v436 = vld [vmem:[%s248 + $0xb8] sm:$0xff]
        %v437 = vld [vmem:[%s248 + $0xc0] sm:$0xff]
        %v438 = vld [vmem:[%s248 + $0xc8] sm:$0xff]
        %v439 = vld [vmem:[%s248 + $0xd0] sm:$0xff]
        %v440 = vld [vmem:[%s248 + $0xd8] sm:$0xff]
        %v441 = vld [vmem:[%s248 + $0xe0] sm:$0xff]
        %v442 = vld [vmem:[%s248 + $0xe8] sm:$0xff]
        %v443 = vld [vmem:[%s248 + $0xf0] sm:$0xff]
        %v444 = vld [vmem:[%s248 + $0xf8] sm:$0xff]
        %v445 = vld [vmem:[%s248 + $0x100] sm:$0xff]
        %v446 = vld [vmem:[%s248 + $0x108] sm:$0xff]
        %v447 = vld [vmem:[%s248 + $0x110] sm:$0xff]
        %v448 = vld [vmem:[%s248 + $0x118] sm:$0xff]
        %v449 = vld [vmem:[%s248 + $0x120] sm:$0xff]
        %v450 = vld [vmem:[%s248 + $0x128] sm:$0xff]
        %v451 = vld [vmem:[%s248 + $0x130] sm:$0xff]
        %v452 = vld [vmem:[%s248 + $0x138] sm:$0xff]
        %v453 = vld [vmem:[%s248 + $0x140] sm:$0xff]
        %v454 = vld [vmem:[%s248 + $0x148] sm:$0xff]
        %v455 = vld [vmem:[%s248 + $0x150] sm:$0xff]
        %v456 = vld [vmem:[%s248 + $0x158] sm:$0xff]
        %v457 = vld [vmem:[%s248 + $0x160] sm:$0xff]
        %v458 = vld [vmem:[%s248 + $0x168] sm:$0xff]
        %v459 = vld [vmem:[%s248 + $0x170] sm:$0xff]
        %v460 = vld [vmem:[%s248 + $0x178] sm:$0xff]
        %v461 = vld [vmem:[%s248 + $0x180] sm:$0xff]
        %v462 = vld [vmem:[%s248 + $0x188] sm:$0xff]
        %v463 = vld [vmem:[%s248 + $0x190] sm:$0xff]
        %v464 = vld [vmem:[%s248 + $0x198] sm:$0xff]
        %v465 = vld [vmem:[%s248 + $0x1a0] sm:$0xff]
        %v466 = vld [vmem:[%s248 + $0x1a8] sm:$0xff]
        %v467 = vld [vmem:[%s248 + $0x1b0] sm:$0xff]
        %v468 = vld [vmem:[%s248 + $0x1b8] sm:$0xff]
        %v469 = vld [vmem:[%s248 + $0x1c0] sm:$0xff]
        %v470 = vld [vmem:[%s248 + $0x1c8] sm:$0xff]
        %v471 = vld [vmem:[%s248 + $0x1d0] sm:$0xff]
        %v472 = vld [vmem:[%s248 + $0x1d8] sm:$0xff]
        %v473 = vld [vmem:[%s248 + $0x1e0] sm:$0xff]
        %v474 = vld [vmem:[%s248 + $0x1e8] sm:$0xff]
        %v475 = vld [vmem:[%s248 + $0x1f0] sm:$0xff]
        %v476 = vld [vmem:[%s248 + $0x1f8] sm:$0xff]
        %477 = vmatprep.subr.mxu0 0.0
        %478 = vmatpush1.msra.mxu0 %v413
        %479 = vmatprep.subr.mxu0 0.0
        %480 = vmatpush1.msra.mxu0 %v414
        %481 = vmatprep.subr.mxu0 0.0
        %482 = vmatpush1.msra.mxu0 %v415
        %483 = vmatprep.subr.mxu0 0.0
        %484 = vmatpush1.msra.mxu0 %v416
        %485 = vmatprep.subr.mxu0 0.0
        %486 = vmatpush1.msra.mxu0 %v417
        %487 = vmatprep.subr.mxu0 0.0
        %488 = vmatpush1.msra.mxu0 %v418
        %489 = vmatprep.subr.mxu0 0.0
        %490 = vmatpush1.msra.mxu0 %v419
        %491 = vmatprep.subr.mxu0 0.0
        %492 = vmatpush1.msra.mxu0 %v420
        %493 = vmatprep.subr.mxu0 0.0
        %494 = vmatpush1.msra.mxu0 %v421
        %495 = vmatprep.subr.mxu0 0.0
        %496 = vmatpush1.msra.mxu0 %v422
        %497 = vmatprep.subr.mxu0 0.0
        %498 = vmatpush1.msra.mxu0 %v423
        %499 = vmatprep.subr.mxu0 0.0
        %500 = vmatpush1.msra.mxu0 %v424
        %501 = vmatprep.subr.mxu0 0.0
        %502 = vmatpush1.msra.mxu0 %v425
        %503 = vmatprep.subr.mxu0 0.0
        %504 = vmatpush1.msra.mxu0 %v426
        %505 = vmatprep.subr.mxu0 0.0
        %506 = vmatpush1.msra.mxu0 %v427
        %507 = vmatprep.subr.mxu0 0.0
        %508 = vmatpush1.msra.mxu0 %v428
        %509 = vmatprep.subr.mxu0 0.0
        %510 = vmatpush1.msra.mxu0 %v429
        %511 = vmatprep.subr.mxu0 0.0
        %512 = vmatpush1.msra.mxu0 %v430
        %513 = vmatprep.subr.mxu0 0.0
        %514 = vmatpush1.msra.mxu0 %v431
        %515 = vmatprep.subr.mxu0 0.0
        %516 = vmatpush1.msra.mxu0 %v432
        %517 = vmatprep.subr.mxu0 0.0
        %518 = vmatpush1.msra.mxu0 %v433
        %519 = vmatprep.subr.mxu0 0.0
        %520 = vmatpush1.msra.mxu0 %v434
        %521 = vmatprep.subr.mxu0 0.0
        %522 = vmatpush1.msra.mxu0 %v435
        %523 = vmatprep.subr.mxu0 0.0
        %524 = vmatpush1.msra.mxu0 %v436
        %525 = vmatprep.subr.mxu0 0.0
        %526 = vmatpush1.msra.mxu0 %v437
        %527 = vmatprep.subr.mxu0 0.0
        %528 = vmatpush1.msra.mxu0 %v438
        %529 = vmatprep.subr.mxu0 0.0
        %530 = vmatpush1.msra.mxu0 %v439
        %531 = vmatprep.subr.mxu0 0.0
        %532 = vmatpush1.msra.mxu0 %v440
        %533 = vmatprep.subr.mxu0 0.0
        %534 = vmatpush1.msra.mxu0 %v441
        %535 = vmatprep.subr.mxu0 0.0
        %536 = vmatpush1.msra.mxu0 %v442
        %537 = vmatprep.subr.mxu0 0.0
        %538 = vmatpush1.msra.mxu0 %v443
        %539 = vmatprep.subr.mxu0 0.0
        %540 = vmatpush1.msra.mxu0 %v444
        %541 = vmatprep.mubr.f32.mxu0 %v384
        %542 = vmatmul.mubr.f32.gmra.mrb[0].mxu0 %v383
        %v543 = vpop.f32.mrb[0].mxu0
        %v544 = vadd.f32 0.0, %v543
        %v545 = vpop.f32.mrb[0].mxu0
        %546 = vmatprep.mubr.f32.mxu0 %v388
        %547 = vmatmul.mubr.f32.gmra.mrb[0].mxu0 %v387
        %v548 = vpop.f32.mrb[0].mxu0
        %v549 = vadd.f32 0.0, %v548
        %v550 = vpop.f32.mrb[0].mxu0
        %551 = vmatprep.mubr.f32.mxu0 %v392
        %552 = vmatmul.mubr.f32.gmra.mrb[0].mxu0 %v391
        %v553 = vpop.f32.mrb[0].mxu0
        %v554 = vadd.f32 0.0, %v553
        %v555 = vpop.f32.mrb[0].mxu0
        %556 = vmatprep.mubr.f32.mxu0 %v396
        %557 = vmatmul.mubr.f32.gmra.mrb[0].mxu0 %v395
        %v558 = vpop.f32.mrb[0].mxu0
        %v559 = vadd.f32 0.0, %v558
        %v560 = vpop.f32.mrb[0].mxu0
        %561 = vmatprep.mubr.f32.mxu0 %v400
        %562 = vmatmul.mubr.f32.gmra.mrb[0].mxu0 %v399
        %v563 = vpop.f32.mrb[0].mxu0
        %v564 = vadd.f32 0.0, %v563
        %v565 = vpop.f32.mrb[0].mxu0
        %566 = vmatprep.mubr.f32.mxu0 %v404
        %567 = vmatmul.mubr.f32.gmra.mrb[0].mxu0 %v403
        %v568 = vpop.f32.mrb[0].mxu0
        %v569 = vadd.f32 0.0, %v568
        %v570 = vpop.f32.mrb[0].mxu0
        %571 = vdwg.mxu0
        %572 = vmatprep.subr.mxu0 0.0
        %573 = vmatpush1.msra.mxu0 %v445
        %574 = vmatprep.subr.mxu0 0.0
        %575 = vmatpush1.msra.mxu0 %v446
        %576 = vmatprep.subr.mxu0 0.0
        %577 = vmatpush1.msra.mxu0 %v447
        %578 = vmatprep.subr.mxu0 0.0
        %579 = vmatpush1.msra.mxu0 %v448
        %580 = vmatprep.subr.mxu0 0.0
        %581 = vmatpush1.msra.mxu0 %v449
        %582 = vmatprep.subr.mxu0 0.0
        %583 = vmatpush1.msra.mxu0 %v450
        %584 = vmatprep.subr.mxu0 0.0
        %585 = vmatpush1.msra.mxu0 %v451
        %586 = vmatprep.subr.mxu0 0.0
        %587 = vmatpush1.msra.mxu0 %v452
        %588 = vmatprep.subr.mxu0 0.0
        %589 = vmatpush1.msra.mxu0 %v453
        %590 = vmatprep.subr.mxu0 0.0
        %591 = vmatpush1.msra.mxu0 %v454
        %592 = vmatprep.subr.mxu0 0.0
        %593 = vmatpush1.msra.mxu0 %v455
        %594 = vmatprep.subr.mxu0 0.0
        %595 = vmatpush1.msra.mxu0 %v456
        %596 = vmatprep.subr.mxu0 0.0
        %597 = vmatpush1.msra.mxu0 %v457
        %598 = vmatprep.subr.mxu0 0.0
        %599 = vmatpush1.msra.mxu0 %v458
        %600 = vmatprep.subr.mxu0 0.0
        %601 = vmatpush1.msra.mxu0 %v459
        %602 = vmatprep.subr.mxu0 0.0
        %603 = vmatpush1.msra.mxu0 %v460
        %604 = vmatprep.subr.mxu0 0.0
        %605 = vmatpush1.msra.mxu0 %v461
        %606 = vmatprep.subr.mxu0 0.0
        %607 = vmatpush1.msra.mxu0 %v462
        %608 = vmatprep.subr.mxu0 0.0
        %609 = vmatpush1.msra.mxu0 %v463
        %610 = vmatprep.subr.mxu0 0.0
        %611 = vmatpush1.msra.mxu0 %v464
        %612 = vmatprep.subr.mxu0 0.0
        %613 = vmatpush1.msra.mxu0 %v465
        %614 = vmatprep.subr.mxu0 0.0
        %615 = vmatpush1.msra.mxu0 %v466
        %616 = vmatprep.subr.mxu0 0.0
        %617 = vmatpush1.msra.mxu0 %v467
        %618 = vmatprep.subr.mxu0 0.0
        %619 = vmatpush1.msra.mxu0 %v468
        %620 = vmatprep.subr.mxu0 0.0
        %621 = vmatpush1.msra.mxu0 %v469
        %622 = vmatprep.subr.mxu0 0.0
        %623 = vmatpush1.msra.mxu0 %v470
        %624 = vmatprep.subr.mxu0 0.0
        %625 = vmatpush1.msra.mxu0 %v471
        %626 = vmatprep.subr.mxu0 0.0
        %627 = vmatpush1.msra.mxu0 %v472
        %628 = vmatprep.subr.mxu0 0.0
        %629 = vmatpush1.msra.mxu0 %v473
        %630 = vmatprep.subr.mxu0 0.0
        %631 = vmatpush1.msra.mxu0 %v474
        %632 = vmatprep.subr.mxu0 0.0
        %633 = vmatpush1.msra.mxu0 %v475
        %634 = vmatprep.subr.mxu0 0.0
        %635 = vmatpush1.msra.mxu0 %v476
        %636 = vmatprep.mubr.f32.mxu0 %v386
        %637 = vmatmul.mubr.f32.gmra.mrb[0].mxu0 %v385
        %v638 = vpop.f32.mrb[0].mxu0
        %v639 = vadd.f32 %v544, %v638
        %v640 = vpop.f32.mrb[0].mxu0
        %641 = vmatprep.mubr.f32.mxu0 %v390
        %642 = vmatmul.mubr.f32.gmra.mrb[0].mxu0 %v389
        %v643 = vpop.f32.mrb[0].mxu0
        %v644 = vadd.f32 %v549, %v643
        %v645 = vpop.f32.mrb[0].mxu0
        %646 = vmatprep.mubr.f32.mxu0 %v394
        %647 = vmatmul.mubr.f32.gmra.mrb[0].mxu0 %v393
        %v648 = vpop.f32.mrb[0].mxu0
        %v649 = vadd.f32 %v554, %v648
        %v650 = vpop.f32.mrb[0].mxu0
        %651 = vmatprep.mubr.f32.mxu0 %v398
        %652 = vmatmul.mubr.f32.gmra.mrb[0].mxu0 %v397
        %v653 = vpop.f32.mrb[0].mxu0
        %v654 = vadd.f32 %v559, %v653
        %v655 = vpop.f32.mrb[0].mxu0
        %656 = vmatprep.mubr.f32.mxu0 %v402
        %657 = vmatmul.mubr.f32.gmra.mrb[0].mxu0 %v401
        %v658 = vpop.f32.mrb[0].mxu0
        %v659 = vadd.f32 %v564, %v658
        %v660 = vpop.f32.mrb[0].mxu0
        %661 = vmatprep.mubr.f32.mxu0 %v406
        %662 = vmatmul.mubr.f32.gmra.mrb[0].mxu0 %v405
        %v663 = vpop.f32.mrb[0].mxu0
        %v664 = vadd.f32 %v569, %v663
        %v665 = vpop.f32.mrb[0].mxu0
        %666 = vdwg.mxu0
        %v667 = vadd.f32 %v407, %v639
        %v668 = vadd.f32 %v408, %v644
        %v669 = vadd.f32 %v409, %v649
        %v670 = vadd.f32 %v410, %v654
        %v671 = vadd.f32 %v411, %v659
        %v672 = vadd.f32 %v412, %v664
        %673 = vst [vmem:[#allocation2] sm:$0xff] %v667
        %674 = vst [vmem:[#allocation2 + $0x8] sm:$0xff] %v668
        %675 = vst [vmem:[#allocation2 + $0x10] sm:$0xff] %v669
        %676 = vst [vmem:[#allocation2 + $0x18] sm:$0xff] %v670
        %677 = vst [vmem:[#allocation2 + $0x20] sm:$0xff] %v671
        %678 = vst [vmem:[#allocation2 + $0x28] sm:$0xff] %v672
        %p679 = scmp.eq.s32.totalorder %s28, 1
        // Predicated region
        $region49: #{tpu_custom_call.1} parent=35 // pred_check
          %p680 = pneg %p679
        $region50: #{tpu_custom_call.1} parent=35 // pred_check_branch
          %682 = sbr.rel (%p680) target = $region52
        $region51: #{tpu_custom_call.1} parent=35 // pred_region
          %s683 = sld [smem:[#allocation3]]
          %v684 = vld [vmem:[#allocation4] sm:$0xff]
          %v685 = vld [vmem:[#allocation4 + $0x8] sm:$0xff]
          %v686 = vld [vmem:[#allocation4 + $0x10] sm:$0xff]
          %v687 = vstv %s683
          %v688 = vmul.f32 %v687, %v684
          %v689 = vmul.f32 %v687, %v685
          %v690 = vmul.f32 %v687, %v686
          %v691 = vld [vmem:[#allocation2] sm:$0xff]
          %v692 = vld [vmem:[#allocation2 + $0x8] sm:$0xff]
          %v693 = vld [vmem:[#allocation2 + $0x10] sm:$0xff]
          %v694 = vld [vmem:[#allocation2 + $0x18] sm:$0xff]
          %v695 = vld [vmem:[#allocation2 + $0x20] sm:$0xff]
          %v696 = vld [vmem:[#allocation2 + $0x28] sm:$0xff]
          %v697 = vadd.f32 %v691, %v688
          %v698 = vadd.f32 %v692, %v689
          %v699 = vadd.f32 %v693, %v690
          %v700 = vadd.f32 %v694, %v688
          %v701 = vadd.f32 %v695, %v689
          %v702 = vadd.f32 %v696, %v690
          %703 = vst [vmem:[#allocation9] sm:$0xff] %v697
          %704 = vst [vmem:[#allocation9 + $0x8] sm:$0xff] %v698
          %705 = vst [vmem:[#allocation9 + $0x10] sm:$0xff] %v699
          %706 = vst [vmem:[#allocation9 + $0x18] sm:$0xff] %v700
          %707 = vst [vmem:[#allocation9 + $0x20] sm:$0xff] %v701
          %708 = vst [vmem:[#allocation9 + $0x28] sm:$0xff] %v702
        $region52: #{tpu_custom_call.1} parent=35 // pred_fallthru
          _
        // Predicated region
        $region53: #{tpu_custom_call.1} parent=35 // pred_check
          %p709 = pneg %p161
        $region54: #{tpu_custom_call.1} parent=35 // pred_check_branch
          %711 = sbr.rel (%p709) target = $region56
        $region55: #{tpu_custom_call.1} parent=35 // pred_region
          %s712 = smul.u32 2, %s26
          %s713 = smul.u32 3, %s27
          %s715 = ssub.s32 768, 768
          %716 = vsyncadd [#allocation6], %s715
          %s717 = smul.addr %s712, 3
          %s718 = sadd.s32 %s713, %s717
          %s719 = smul.addr %s718, 128
          %s720 = scalar_lea.hbm %s4, %s719
          %s721 = sshll.u32 [#allocation9], 4
          %s722 = int_to_ptr.vmem [resolvable:$true] %s721
          %727 = dma.vmem_to_hbm [thread:$0]  %s722, 768, %s720, [#allocation6], 128, 128, 8
        $region56: #{tpu_custom_call.1} parent=35 // pred_fallthru
          _
        // Predicated region
        $region57: #{tpu_custom_call.1} parent=35 // pred_check
          %p728 = pneg %p161
        $region58: #{tpu_custom_call.1} parent=35 // pred_check_branch
          %730 = sbr.rel (%p728) target = $region60
        $region59: #{tpu_custom_call.1} parent=35 // pred_region
          %731 = dma.done [#allocation6], 768
        $region60: #{tpu_custom_call.1} parent=35 // pred_fallthru
          _
      $region36: #{tpu_custom_call.1} parent=5 // pred_fallthru
        _
      %p732 = scmp.le.s32.totalorder 2, %s16
      // Predicated region
      $region61: #{tpu_custom_call.1} parent=5 // pred_check
        %p733 = pneg %p732
      $region62: #{tpu_custom_call.1} parent=5 // pred_check_branch
        %735 = sbr.rel (%p733) target = $region64
      $region63: #{tpu_custom_call.1} parent=5 // pred_region
        %s736 = ssub.s32 %s16, 2
      $region64: #{tpu_custom_call.1} parent=5 // pred_fallthru
        _
    $region6: #{tpu_custom_call.1} parent=1 // loop_footer
      %s20 = sadd.s32 1, %s16
    $region7: #{tpu_custom_call.1} parent=1 // loop_footer_branch
      %15 = sbr.rel target = $region3
    $region8: #{tpu_custom_call.1} parent=1 // loop_exit
      _
    %737 = vsyncpa [#allocation5], 1
    %s738 = scalar_lea.sflag [#allocation5], 1
    %739 = vsyncpa %s738, 1
    %740 = vsyncpa [#allocation8], 1
    %s741 = scalar_lea.sflag [#allocation8], 1
    %742 = vsyncpa %s741, 1
    %743 = vsyncpa [#allocation6], 1
    %s744 = scalar_lea.sflag [#allocation6], 1
    %745 = vsyncpa %s744, 1

</llo_original>
